<compile_context>
chip_gen: v7x
topology: tpu7x:2x2x1
jax: 0.10.0
libtpu: 0.0.40
codegen_flags: <defaults>
</compile_context>

<pallas_src>
import functools

import jax
import jax.numpy as jnp
from jax import lax
from jax.experimental import pallas as pl
from jax.experimental.pallas import tpu as pltpu


# ---------------------------------------------------------------------------
# Pallas kernel: adaLN-Zero modulated LayerNorm for one (seq_tile, D) slab.
#   x_ref  : (seq_tile, D)  hidden-state tile (batch dim squeezed out)
#   ss_ref : (2, D)         rows = [shift_msa, scale_msa] for this batch element
#   out_ref: (seq_tile, D)
# ---------------------------------------------------------------------------
def _ada_ln_zero_kernel(x_ref, ss_ref, out_ref, *, eps):
    x = x_ref[...].astype(jnp.float32)                       # (TS, D)
    d = x.shape[-1]
    inv_d = 1.0 / float(d)

    # Fused moments: the two lane reductions are independent (no mean -> center -> var
    # serial chain), so XLU reductions and the VPU x*x overlap.
    sum_x = jnp.sum(x, axis=-1, keepdims=True)               # (TS, 1)
    sum_x2 = jnp.sum(x * x, axis=-1, keepdims=True)          # (TS, 1)
    mean = sum_x * inv_d
    var = jnp.maximum(sum_x2 * inv_d - mean * mean, 0.0)     # guard tiny cancellation
    inv_std = lax.rsqrt(var + eps)                           # (TS, 1)

    shift = ss_ref[0, :].astype(jnp.float32)                 # (D,)
    scale = ss_ref[1, :].astype(jnp.float32)                 # (D,)

    ln = (x - mean) * inv_std                                # (TS, D)
    out_ref[...] = (ln * (1.0 + scale) + shift).astype(out_ref.dtype)


# ---------------------------------------------------------------------------
# Budget-driven sequence-tile selection.
#   Per grid step, VMEM residency ~= 2 (in+out) * 2 (double buffer) * tile_bytes
#                                   + ~3 full-tile f32 temporaries inside the kernel.
# ---------------------------------------------------------------------------
def _choose_seq_tile(S, D, B, itemsize, vmem_budget_bytes, min_grid_steps=4):
    per_row_bytes = D * (4 * itemsize + 3 * 4)
    tile = max(1, int(vmem_budget_bytes) // per_row_bytes)

    # Keep enough grid steps for megacore sharding (>= ~2 steps per core on v7x).
    tiles_wanted = max(1, -(-min_grid_steps // B))           # ceil(min_grid_steps / B)
    tile = min(tile, -(-S // tiles_wanted))                  # ceil(S / tiles_wanted)

    if tile >= S:
        return S                                             # full dim -> exempt from 8-row rule
    return min(S, max(8, (tile // 8) * 8))                   # 8-aligned sublane dim


# ---------------------------------------------------------------------------
# Wrapper: mirrors ChromaAdaLayerNormZeroPruned.forward (emb passed in).
# ---------------------------------------------------------------------------
def chroma_ada_layer_norm_zero_pruned(x, emb, *, eps=1e-6, seq_tile=None,
                                      vmem_budget_bytes=20 * 1024 * 1024):
    """
    x   : (B, S, D)          hidden states
    emb : (B, M, N) with M*N == 6*D   (PyTorch does emb.flatten(1, 2).chunk(6, dim=1))
    Returns (x_mod, gate_msa, shift_mlp, scale_mlp, gate_mlp).
    """
    B, S, D = x.shape
    assert emb.shape[0] == B and emb.shape[1] * emb.shape[2] == 6 * D, (
        "emb must flatten to (B, 6*D)")
    # For lane-dense, unmasked stores D should be a multiple of 128 (true for Chroma, D=3072).

    emb6 = emb.reshape(B, 6, D)        # rows: shift_msa, scale_msa, gate_msa, shift_mlp, scale_mlp, gate_mlp
    shift_scale = emb6[:, 0:2, :]      # only what the kernel needs -> (B, 2, D)

    itemsize = jnp.dtype(x.dtype).itemsize
    if seq_tile is None:
        seq_tile = _choose_seq_tile(S, D, B, itemsize, vmem_budget_bytes)
    num_tiles = pl.cdiv(S, seq_tile)   # partial last block handled by masked writeback

    # Advisory scheduling hint for XLA around the custom call (mem-bound op).
    cost = pl.CostEstimate(
        flops=7 * B * S * D,                       # 2 reductions + modulate/normalize
        transcendentals=B * S,                     # one rsqrt per row
        bytes_accessed=(2 * B * S * D + 2 * B * D) * itemsize,
    )

    x_out = pl.pallas_call(
        functools.partial(_ada_ln_zero_kernel, eps=float(eps)),
        out_shape=jax.ShapeDtypeStruct((B, S, D), x.dtype),
        grid=(B, num_tiles),
        in_specs=[
            pl.BlockSpec((None, seq_tile, D), lambda b, s: (b, s, 0)),   # x tile
            pl.BlockSpec((None, 2, D), lambda b, s: (b, 0, 0)),          # shift/scale rows
        ],
        out_specs=pl.BlockSpec((None, seq_tile, D), lambda b, s: (b, s, 0)),
        compiler_params=pltpu.CompilerParams(
            dimension_semantics=("parallel", "parallel"),
            vmem_limit_bytes=32 * 1024 * 1024,     # safe on v5e/v6e/v7x; budget stays under it
        ),
        cost_estimate=cost,
    )(x, shift_scale)

    # Pure pass-through chunks: no compute -> wrapper-side slices (no extra HBM round trip).
    gate_msa = emb6[:, 2, :]
    shift_mlp = emb6[:, 3, :]
    scale_mlp = emb6[:, 4, :]
    gate_mlp = emb6[:, 5, :]
    return x_out, gate_msa, shift_mlp, scale_mlp, gate_mlp


# ---------------------------------------------------------------------------
# Pure-JAX reference (mirrors the PyTorch forward) for the correctness check.
# ---------------------------------------------------------------------------
def reference_forward(x, emb, *, eps=1e-6):
    B, S, D = x.shape
    emb_flat = emb.reshape(B, -1)
    shift_msa, scale_msa, gate_msa, shift_mlp, scale_mlp, gate_mlp = jnp.split(emb_flat, 6, axis=1)
    mean = jnp.mean(x, axis=-1, keepdims=True)
    var = jnp.mean((x - mean) ** 2, axis=-1, keepdims=True)
    ln = (x - mean) / jnp.sqrt(var + eps)
    x_mod = ln * (1 + scale_msa[:, None, :]) + shift_msa[:, None, :]
    return x_mod.astype(x.dtype), gate_msa, shift_mlp, scale_mlp, gate_mlp


# TODO(synk): the `num_embeddings is not None` branch (CombinedTimestepLabelEmbeddings) is an
# unrelated embedding MLP and is not implemented here; the pruned forward takes `emb` directly.

if __name__ == "__main__":
    B, S, D = 2, 16, 128                       # batch, seq, embedding_dim

    key = jax.random.PRNGKey(0)
    k1, k2 = jax.random.split(key)
    x = jax.random.normal(k1, (B, S, D), jnp.float32)
    emb = jax.random.normal(k2, (B, 6, D), jnp.float32)    # flattens to (B, 6*D)

    outs = chroma_ada_layer_norm_zero_pruned(x, emb)
    outs = jax.block_until_ready(outs)

    refs = reference_forward(x, emb)
    names = ["x", "gate_msa", "shift_mlp", "scale_mlp", "gate_mlp"]
    for name, o, r in zip(names, outs, refs):
        assert o.shape == r.shape, (name, o.shape, r.shape)
        assert jnp.allclose(o, r, atol=1e-4, rtol=1e-4), f"mismatch vs reference in {name}"

    print("KERNEL_OK")
</pallas_src>

<mosaic_0001>
module attributes {stable_mosaic.version = 11 : i64} {
  func.func @_ada_ln_zero_kernel(%arg0: i32, %arg1: i32, %arg2: memref<1x8x128xf32, #tpu.memory_space<vmem>>, %arg3: memref<1x2x128xf32, #tpu.memory_space<vmem>>, %arg4: memref<1x8x128xf32, #tpu.memory_space<vmem>>) attributes {dimension_semantics = [#tpu.dimension_semantics<parallel>, #tpu.dimension_semantics<parallel>], iteration_bounds = array<i64: 2, 2>, scalar_prefetch = 0 : i64, scratch_operands = 0 : i64, tpu.core_type = #tpu.core_type<tc>, window_params = [{transform_indices = @transform_0, window_bounds = array<i64: 1, 8, 128>}, {transform_indices = @transform_1, window_bounds = array<i64: 1, 2, 128>}, {transform_indices = @transform_2, window_bounds = array<i64: 1, 8, 128>}]} {
    %c0 = arith.constant 0 : index
    %c0_0 = arith.constant 0 : index
    %c0_1 = arith.constant 0 : index
    %0 = vector.load %arg2[%c0, %c0_0, %c0_1] : memref<1x8x128xf32, #tpu.memory_space<vmem>>, vector<1x8x128xf32>
    %1 = vector.shape_cast %0 : vector<1x8x128xf32> to vector<8x128xf32>
    %cst = arith.constant dense<0.000000e+00> : vector<8xf32>
    %2 = vector.multi_reduction <add>, %1, %cst [1] : vector<8x128xf32> to vector<8xf32>
    %3 = vector.shape_cast %2 : vector<8xf32> to vector<8x1xf32>
    %4 = arith.mulf %1, %1 : vector<8x128xf32>
    %cst_2 = arith.constant dense<0.000000e+00> : vector<8xf32>
    %5 = vector.multi_reduction <add>, %4, %cst_2 [1] : vector<8x128xf32> to vector<8xf32>
    %6 = vector.shape_cast %5 : vector<8xf32> to vector<8x1xf32>
    %cst_3 = arith.constant 7.812500e-03 : f32
    %7 = vector.broadcast %cst_3 : f32 to vector<8x1xf32>
    %8 = arith.mulf %3, %7 : vector<8x1xf32>
    %cst_4 = arith.constant 7.812500e-03 : f32
    %9 = vector.broadcast %cst_4 : f32 to vector<8x1xf32>
    %10 = arith.mulf %6, %9 : vector<8x1xf32>
    %11 = arith.mulf %8, %8 : vector<8x1xf32>
    %12 = arith.subf %10, %11 : vector<8x1xf32>
    %cst_5 = arith.constant 0.000000e+00 : f32
    %13 = vector.broadcast %cst_5 : f32 to vector<8x1xf32>
    %14 = arith.maximumf %12, %13 : vector<8x1xf32>
    %cst_6 = arith.constant 9.99999997E-7 : f32
    %15 = vector.broadcast %cst_6 : f32 to vector<8x1xf32>
    %16 = arith.addf %14, %15 : vector<8x1xf32>
    %17 = math.rsqrt %16 : vector<8x1xf32>
    %c0_7 = arith.constant 0 : index
    %c0_8 = arith.constant 0 : index
    %c0_9 = arith.constant 0 : index
    %18 = vector.load %arg3[%c0_7, %c0_8, %c0_9] : memref<1x2x128xf32, #tpu.memory_space<vmem>>, vector<1x1x128xf32>
    %19 = vector.shape_cast %18 : vector<1x1x128xf32> to vector<128xf32>
    %c0_10 = arith.constant 0 : index
    %c1 = arith.constant 1 : index
    %c0_11 = arith.constant 0 : index
    %20 = vector.load %arg3[%c0_10, %c1, %c0_11] : memref<1x2x128xf32, #tpu.memory_space<vmem>>, vector<1x1x128xf32>
    %21 = vector.shape_cast %20 : vector<1x1x128xf32> to vector<128xf32>
    %22 = vector.broadcast %8 : vector<8x1xf32> to vector<8x128xf32>
    %23 = arith.subf %1, %22 : vector<8x128xf32>
    %24 = vector.broadcast %17 : vector<8x1xf32> to vector<8x128xf32>
    %25 = arith.mulf %23, %24 : vector<8x128xf32>
    %cst_12 = arith.constant 1.000000e+00 : f32
    %26 = vector.broadcast %cst_12 : f32 to vector<128xf32>
    %27 = arith.addf %26, %21 : vector<128xf32>
    %28 = vector.shape_cast %27 : vector<128xf32> to vector<1x128xf32>
    %29 = vector.broadcast %28 : vector<1x128xf32> to vector<8x128xf32>
    %30 = arith.mulf %25, %29 : vector<8x128xf32>
    %31 = vector.shape_cast %19 : vector<128xf32> to vector<1x128xf32>
    %32 = vector.broadcast %31 : vector<1x128xf32> to vector<8x128xf32>
    %33 = arith.addf %30, %32 : vector<8x128xf32>
    %c0_13 = arith.constant 0 : index
    %c0_14 = arith.constant 0 : index
    %c0_15 = arith.constant 0 : index
    %34 = vector.load %arg4[%c0_13, %c0_14, %c0_15] : memref<1x8x128xf32, #tpu.memory_space<vmem>>, vector<1x8x128xf32>
    %35 = vector.shape_cast %34 : vector<1x8x128xf32> to vector<8x128xf32>
    %36 = vector.shape_cast %33 : vector<8x128xf32> to vector<1x8x128xf32>
    tpu.vector_store %arg4[%c0_13, %c0_14, %c0_15], %36 {strides = array<i32>} : memref<1x8x128xf32, #tpu.memory_space<vmem>>, vector<1x8x128xf32>,
    return
  }
  func.func @transform_0(%arg0: i32, %arg1: i32) -> (i32, i32, i32) {
    %c0_i32 = arith.constant 0 : i32
    %c0_i32_0 = arith.constant 0 : i32
    return %arg0, %arg1, %c0_i32 : i32, i32, i32
  }
  func.func @transform_1(%arg0: i32, %arg1: i32) -> (i32, i32, i32) {
    %c0_i32 = arith.constant 0 : i32
    %c0_i32_0 = arith.constant 0 : i32
    %c0_i32_1 = arith.constant 0 : i32
    return %arg0, %c0_i32, %c0_i32_0 : i32, i32, i32
  }
  func.func @transform_2(%arg0: i32, %arg1: i32) -> (i32, i32, i32) {
    %c0_i32 = arith.constant 0 : i32
    %c0_i32_0 = arith.constant 0 : i32
    return %arg0, %arg1, %c0_i32 : i32, i32, i32
  }
}

</mosaic_0001>

<llo_original>
// kernel: tpu_custom_call.1
$region0: #{tpu_custom_call.1}
  #allocation0 [shape = 'u32[]', space=smem, size = 0x4, offset = 0x4, fixed_abs, tag = 'smem constant byte address 0x4 - core index']
  #allocation1 [shape = 'u32[144,128]{1,0:T(1,128)}', space=vmem, size = 0x12000, scoped, tag = 'internal scratch']
  %s0 = inlined_call_operand.hbm [shape: f32[2,16,128], index: 0, kind: input, shape index: {}]
  %s1 = inlined_call_operand.hbm [shape: f32[2,2,128], index: 1, kind: input, shape index: {}]
  %s2 = inlined_call_operand.hbm [shape: f32[2,16,128], index: 2, kind: output, shape index: {}]
  %s3 = sld [smem:[#allocation0]]
  $region49: #{tpu_custom_call.1} parent=0
    _
  %s5 = ssub.s32 1, %s3
  %s6 = scalar_select 0, %s5, %s3
  $region1: #{tpu_custom_call.1} parent=0
    #allocation2 [shape = 'u8[8192]{0}', space=vmem, size = 0x2000, scoped, tag = 'input window, operand 0']
    #allocation3 [shape = 's32[2]{0}', space=sflag, size = 0x8, scoped, tag = 'scoped memory for tpu_custom_call.1']
    #allocation4 [shape = 's32[2]{0}', space=sflag, size = 0x8, scoped, tag = 'scoped memory for tpu_custom_call.1']
    #allocation5 [shape = 'u8[2048]{0}', space=vmem, size = 0x800, scoped, tag = 'input window, operand 1']
    #allocation6 [shape = 's32[2]{0}', space=sflag, size = 0x8, scoped, tag = 'scoped memory for tpu_custom_call.1']
    #allocation7 [shape = 'u8[8192]{0}', space=vmem, size = 0x2000, scoped, tag = 'output window, operand 0']
    %7 = vsyncpa [#allocation3], 0
    %s8 = scalar_lea.sflag [#allocation3], 1
    %9 = vsyncpa %s8, 0
    %10 = vsyncpa [#allocation6], 0
    %s11 = scalar_lea.sflag [#allocation6], 1
    %12 = vsyncpa %s11, 0
    %13 = vsyncpa [#allocation4], 0
    %s14 = scalar_lea.sflag [#allocation4], 1
    %15 = vsyncpa %s14, 0
    loop: start=0, step=1, limit=6
    $region2: #{tpu_custom_call.1} parent=1 // loop_pre_header
      _
    $region3: #{tpu_custom_call.1} parent=1 // loop_header
      %s17 = sphi 0, %s21
      %p18 = scmp.ge.s32.totalorder %s17, 6
      %s24 = sphi 0, %s36
      %s25 = sphi 0, %s32
      %s26 = sphi 0, %s24
      %s27 = sphi 0, %s25
      %s28 = sphi 0, %s26
      %s29 = sphi 0, %s27
      %s41 = sphi 0, %s43
      %s44 = sphi 0, %s41
      %s45 = sphi 0, %s44
      %s61 = sphi 0, %s45
      %s67 = sphi 0, %s69
      %s70 = sphi 0, %s67
      %s71 = sphi 0, %s70
      %s87 = sphi 0, %s71
      %s95 = sphi 0, %s97
      %s98 = sphi 0, %s95
      %s99 = sphi 0, %s98
      %s115 = sphi 0, %s99
    $region4: #{tpu_custom_call.1} parent=1 // loop_header_branch
      %20 = sbr.rel (%p18) target = $region8
    $region5: #{tpu_custom_call.1} parent=1 // loop_body
      %s22 = ssub.s32 %s17, 1
      %s23 = ssub.s32 %s17, 2
      %s30 = sadd.s32 1, %s25
      %p31 = scmp.ge.s32.totalorder %s30, 2
      %s32 = scalar_select %p31, 0, %s30
      %s33 = sadd.s32 1, %s24
      %s34 = scalar_select %p31, %s33, %s24
      %p35 = scmp.ge.s32.totalorder %s34, 2
      %s36 = scalar_select %p35, 0, %s34
      %s37 = ssub.s32 %s24, %s36
      %s38 = ssub.s32 %s25, %s32
      %s39 = sor.u32 %s37, %s38
      %p40 = scmp.eq.s32.totalorder %s39, 0
      %s42 = sadd.s32 %s41, 1
      %s43 = scalar_select %p40, %s41, %s42
      %p46 = pneg %p40
      %p47 = scmp.eq.s32.totalorder %s17, 3
      %p48 = por %p46, %p47
      %p49 = scmp.ne.s32.totalorder %s41, %s44
      %p50 = scmp.eq.s32.totalorder %s17, 0
      %p51 = por %p49, %p50
      %p52 = scmp.ne.s32.totalorder %s41, %s44
      %p53 = scmp.eq.s32.totalorder %s22, 3
      %p54 = por %p52, %p53
      %p55 = scmp.ne.s32.totalorder %s44, %s45
      %p56 = scmp.eq.s32.totalorder %s22, 0
      %p57 = por %p55, %p56
      %p58 = scmp.ne.s32.totalorder %s44, %s45
      %p59 = scmp.eq.s32.totalorder %s23, 3
      %p60 = por %p58, %p59
      %p62 = scmp.ne.s32.totalorder %s45, %s61
      %p63 = scmp.eq.s32.totalorder %s23, 0
      %p64 = por %p62, %p63
      %s65 = ssub.s32 %s24, %s36
      %p66 = scmp.eq.s32.totalorder %s65, 0
      %s68 = sadd.s32 %s67, 1
      %s69 = scalar_select %p66, %s67, %s68
      %p72 = pneg %p66
      %p73 = scmp.eq.s32.totalorder %s17, 3
      %p74 = por %p72, %p73
      %p75 = scmp.ne.s32.totalorder %s67, %s70
      %p76 = scmp.eq.s32.totalorder %s17, 0
      %p77 = por %p75, %p76
      %p78 = scmp.ne.s32.totalorder %s67, %s70
      %p79 = scmp.eq.s32.totalorder %s22, 3
      %p80 = por %p78, %p79
      %p81 = scmp.ne.s32.totalorder %s70, %s71
      %p82 = scmp.eq.s32.totalorder %s22, 0
      %p83 = por %p81, %p82
      %p84 = scmp.ne.s32.totalorder %s70, %s71
      %p85 = scmp.eq.s32.totalorder %s23, 3
      %p86 = por %p84, %p85
      %p88 = scmp.ne.s32.totalorder %s71, %s87
      %p89 = scmp.eq.s32.totalorder %s23, 0
      %p90 = por %p88, %p89
      %s91 = ssub.s32 %s24, %s36
      %s92 = ssub.s32 %s25, %s32
      %s93 = sor.u32 %s91, %s92
      %p94 = scmp.eq.s32.totalorder %s93, 0
      %s96 = sadd.s32 %s95, 1
      %s97 = scalar_select %p94, %s95, %s96
      %p100 = pneg %p94
      %p101 = scmp.eq.s32.totalorder %s17, 3
      %p102 = por %p100, %p101
      %p103 = scmp.ne.s32.totalorder %s95, %s98
      %p104 = scmp.eq.s32.totalorder %s17, 0
      %p105 = por %p103, %p104
      %p106 = scmp.ne.s32.totalorder %s95, %s98
      %p107 = scmp.eq.s32.totalorder %s22, 3
      %p108 = por %p106, %p107
      %p109 = scmp.ne.s32.totalorder %s98, %s99
      %p110 = scmp.eq.s32.totalorder %s22, 0
      %p111 = por %p109, %p110
      %p112 = scmp.ne.s32.totalorder %s98, %s99
      %p113 = scmp.eq.s32.totalorder %s23, 3
      %p114 = por %p112, %p113
      %p116 = scmp.ne.s32.totalorder %s99, %s115
      %p117 = scmp.eq.s32.totalorder %s23, 0
      %p118 = por %p116, %p117
      %p119 = scmp.le.s32.totalorder 1, %s17
      %p120 = scmp.lt.s32.totalorder %s17, 5
      %p121 = pnand %p119, %p120
      %p122 = pneg %p121
      // Predicated region
      $region9: #{tpu_custom_call.1} parent=5 // pred_check
        _
      $region10: #{tpu_custom_call.1} parent=5 // pred_check_branch
        %124 = sbr.rel (%p121) target = $region12
      $region11: #{tpu_custom_call.1} parent=5 // pred_region
        %s125 = ssub.s32 %s17, 1
      $region12: #{tpu_custom_call.1} parent=5 // pred_fallthru
        _
      %p126 = scmp.lt.s32.totalorder %s17, 4
      // Predicated region
      $region13: #{tpu_custom_call.1} parent=5 // pred_check
        %p127 = pneg %p126
      $region14: #{tpu_custom_call.1} parent=5 // pred_check_branch
        %129 = sbr.rel (%p127) target = $region16
      $region15: #{tpu_custom_call.1} parent=5 // pred_region
        // Predicated region
        $region17: #{tpu_custom_call.1} parent=15 // pred_check
          %p130 = pneg %p51
        $region18: #{tpu_custom_call.1} parent=15 // pred_check_branch
          %132 = sbr.rel (%p130) target = $region20
        $region19: #{tpu_custom_call.1} parent=15 // pred_region
          %s133 = sand.u32 %s41, 1
          %s134 = scalar_lea.sflag [#allocation3], %s133
          %s135 = sand.u32 %s41, 1
          %s136 = smul.addr %s135, 8
          %s137 = scalar_lea.vmem [#allocation2], %s136
          %s139 = ssub.s32 128, 128
          %140 = vsyncadd %s134, %s139
          %s141 = smul.addr %s24, 2
          %s142 = sadd.s32 %s25, %s141
          %s143 = smul.addr %s142, 128
          %s144 = scalar_lea.hbm %s0, %s143
          %s146 = sshll.u32 %s137, 4
          %s147 = int_to_ptr.vmem [resolvable:$true] %s146
          %149 = dma.hbm_to_vmem [thread:$0]  %s144, 128, %s147, %s134
        $region20: #{tpu_custom_call.1} parent=15 // pred_fallthru
          _
        // Predicated region
        $region21: #{tpu_custom_call.1} parent=15 // pred_check
          %p150 = pneg %p77
        $region22: #{tpu_custom_call.1} parent=15 // pred_check_branch
          %152 = sbr.rel (%p150) target = $region24
        $region23: #{tpu_custom_call.1} parent=15 // pred_region
          %s153 = sand.u32 %s67, 1
          %s154 = scalar_lea.sflag [#allocation6], %s153
          %s155 = sand.u32 %s67, 1
          %s156 = smul.addr %s155, 2
          %s157 = scalar_lea.vmem [#allocation5], %s156
          %s159 = ssub.s32 32, 32
          %160 = vsyncadd %s154, %s159
          %s161 = smul.addr %s24, 32
          %s162 = scalar_lea.hbm %s1, %s161
          %s164 = sshll.u32 %s157, 4
          %s165 = int_to_ptr.vmem [resolvable:$true] %s164
          %167 = dma.hbm_to_vmem [thread:$0]  %s162, 32, %s165, %s154
        $region24: #{tpu_custom_call.1} parent=15 // pred_fallthru
          _
      $region16: #{tpu_custom_call.1} parent=5 // pred_fallthru
        _
      %p168 = scmp.le.s32.totalorder 1, %s17
      %p169 = scmp.lt.s32.totalorder %s17, 5
      %p170 = pnand %p168, %p169
      %p171 = pneg %p170
      // Predicated region
      $region25: #{tpu_custom_call.1} parent=5 // pred_check
        _
      $region26: #{tpu_custom_call.1} parent=5 // pred_check_branch
        %173 = sbr.rel (%p170) target = $region28
      $region27: #{tpu_custom_call.1} parent=5 // pred_region
        %s174 = ssub.s32 %s17, 1
        %s175 = sand.u32 %s44, 1
        %s176 = scalar_lea.sflag [#allocation3], %s175
        %s177 = sand.u32 %s44, 1
        %s178 = smul.addr %s177, 8
        %s179 = scalar_lea.vmem [#allocation2], %s178
        // Predicated region
        $region29: #{tpu_custom_call.1} parent=27 // pred_check
          %p180 = pneg %p57
        $region30: #{tpu_custom_call.1} parent=27 // pred_check_branch
          %182 = sbr.rel (%p180) target = $region32
        $region31: #{tpu_custom_call.1} parent=27 // pred_region
          %183 = dma.done %s176, 128
        $region32: #{tpu_custom_call.1} parent=27 // pred_fallthru
          _
        %s184 = sand.u32 %s70, 1
        %s185 = scalar_lea.sflag [#allocation6], %s184
        %s186 = sand.u32 %s70, 1
        %s187 = smul.addr %s186, 2
        %s188 = scalar_lea.vmem [#allocation5], %s187
        // Predicated region
        $region33: #{tpu_custom_call.1} parent=27 // pred_check
          %p189 = pneg %p83
        $region34: #{tpu_custom_call.1} parent=27 // pred_check_branch
          %191 = sbr.rel (%p189) target = $region36
        $region35: #{tpu_custom_call.1} parent=27 // pred_region
          %192 = dma.done %s185, 32
        $region36: #{tpu_custom_call.1} parent=27 // pred_fallthru
          _
        %s193 = sand.u32 %s44, 1
        %s194 = scalar_lea.sflag [#allocation3], %s193
        %s195 = sand.u32 %s44, 1
        %s196 = smul.addr %s195, 8
        %s197 = scalar_lea.vmem [#allocation2], %s196
        %p198 = pneg %p57
        %p199 = pneg %p54
        %s200 = sand.u32 %s70, 1
        %s201 = scalar_lea.sflag [#allocation6], %s200
        %s202 = sand.u32 %s70, 1
        %s203 = smul.addr %s202, 2
        %s204 = scalar_lea.vmem [#allocation5], %s203
        %p205 = pneg %p83
        %p206 = pneg %p80
        %p207 = pneg %p111
        %p208 = pneg %p108
        %s209 = sand.u32 %s98, 1
        %s210 = scalar_lea.sflag [#allocation4], %s209
        %s211 = sand.u32 %s98, 1
        %s212 = smul.addr %s211, 8
        %s213 = scalar_lea.vmem [#allocation7], %s212
        %v214 = vld [vmem:[%s179] sm:$0xff]
        %215 = vadd.xlane.f32.xlu0 %v214
        %v216 = vpop.xlane.xlu0 %215
        %v217 = vmul.f32 %v214, %v214
        %218 = vadd.xlane.f32.xlu0 %v217
        %v219 = vpop.xlane.xlu0 %218
        %v220 = vmul.f32 %v216, 0.0078125
        %v221 = vmul.f32 %v219, 0.0078125
        %v222 = vmul.f32 %v220, %v220
        %v223 = vsub.f32 %v221, %v222
        %v224 = vmax.f32 %v223, 0.0
        %v225 = vadd.f32 %v224, 1e-06
        %v226 = vrsqrt.pop %v225
        %v227 = vld [vmem:[%s188] sm:$0x1]
        %v228 = vld [vmem:[%s188 + $0x1] sm:$0x1]
        %v229 = vsub.f32 %v214, %v220
        %v230 = vmul.f32 %v229, %v226
        %v231 = vadd.f32 %v228, 1.0
        %v232 = vlaneseq
        %v233 = vshrl.u32 %v232, 7
        %v234 = vsub.s32 0, %v233
        %v235 = vrot.slane %v231, %v234
        %v236 = vmul.f32 %v230, %v235
        %v237 = vlaneseq
        %v238 = vshrl.u32 %v237, 7
        %v239 = vsub.s32 0, %v238
        %v240 = vrot.slane %v227, %v239
        %v241 = vadd.f32 %v236, %v240
        %242 = vst [vmem:[%s213] sm:$0xff] %v241
        %s243 = sand.u32 %s98, 1
        %s244 = scalar_lea.sflag [#allocation4], %s243
        %s245 = sand.u32 %s98, 1
        %s246 = smul.addr %s245, 8
        %s247 = scalar_lea.vmem [#allocation7], %s246
        // Predicated region
        $region37: #{tpu_custom_call.1} parent=27 // pred_check
          %p248 = pneg %p108
        $region38: #{tpu_custom_call.1} parent=27 // pred_check_branch
          %250 = sbr.rel (%p248) target = $region40
        $region39: #{tpu_custom_call.1} parent=27 // pred_region
          %s252 = ssub.s32 128, 128
          %253 = vsyncadd %s244, %s252
          %s254 = smul.addr %s26, 2
          %s255 = sadd.s32 %s27, %s254
          %s256 = smul.addr %s255, 128
          %s257 = scalar_lea.hbm %s2, %s256
          %s259 = sshll.u32 %s247, 4
          %s260 = int_to_ptr.vmem [resolvable:$true] %s259
          %262 = dma.vmem_to_hbm [thread:$0]  %s260, 128, %s257, %s244
        $region40: #{tpu_custom_call.1} parent=27 // pred_fallthru
          _
      $region28: #{tpu_custom_call.1} parent=5 // pred_fallthru
        _
      %p263 = scmp.le.s32.totalorder 2, %s17
      // Predicated region
      $region41: #{tpu_custom_call.1} parent=5 // pred_check
        %p264 = pneg %p263
      $region42: #{tpu_custom_call.1} parent=5 // pred_check_branch
        %266 = sbr.rel (%p264) target = $region44
      $region43: #{tpu_custom_call.1} parent=5 // pred_region
        %s267 = ssub.s32 %s17, 2
        // Predicated region
        $region45: #{tpu_custom_call.1} parent=43 // pred_check
          %p268 = pneg %p114
        $region46: #{tpu_custom_call.1} parent=43 // pred_check_branch
          %270 = sbr.rel (%p268) target = $region48
        $region47: #{tpu_custom_call.1} parent=43 // pred_region
          %s271 = sand.u32 %s99, 1
          %s272 = scalar_lea.sflag [#allocation4], %s271
          %s273 = sand.u32 %s99, 1
          %s274 = smul.addr %s273, 8
          %s275 = scalar_lea.vmem [#allocation7], %s274
          %276 = dma.done %s272, 128
        $region48: #{tpu_custom_call.1} parent=43 // pred_fallthru
          _
      $region44: #{tpu_custom_call.1} parent=5 // pred_fallthru
        _
    $region6: #{tpu_custom_call.1} parent=1 // loop_footer
      %s21 = sadd.s32 1, %s17
    $region7: #{tpu_custom_call.1} parent=1 // loop_footer_branch
      %16 = sbr.rel target = $region3
    $region8: #{tpu_custom_call.1} parent=1 // loop_exit
      _
    %277 = vsyncpa [#allocation3], 1
    %s278 = scalar_lea.sflag [#allocation3], 1
    %279 = vsyncpa %s278, 1
    %280 = vsyncpa [#allocation6], 1
    %s281 = scalar_lea.sflag [#allocation6], 1
    %282 = vsyncpa %s281, 1
    %283 = vsyncpa [#allocation4], 1
    %s284 = scalar_lea.sflag [#allocation4], 1
    %285 = vsyncpa %s284, 1

</llo_original>
